<compile_context>
chip_gen: v7x
topology: tpu7x:2x2x1
jax: 0.10.0
libtpu: 0.0.40
codegen_flags: <defaults>
</compile_context>

<pallas_src>
import functools

import jax
import jax.numpy as jnp
from jax import lax
from jax.experimental import pallas as pl
from jax.experimental.pallas import tpu as pltpu


def _round_up(n, m):
    return (n + m - 1) // m * m


def _rfrb_kernel(shifts, cip, cop,
                 xp_ref,      # (cip, P)  pooled x1, channels on sublanes
                 x2_ref,      # (cop, P)
                 keep_ref,    # (1, P)    1.0 where label != 0 else 0.0
                 mask_ref,    # (9, P)    per-tap border-validity masks
                 w1_ref, b1_ref, w2_ref, b2_ref, w3_ref, b3_ref,
                 out_ref,     # (cop, P)
                 col_ref):    # (9*max(cip, cop), P) shared im2col^T scratch
    # Hoist the 9 tap masks once; reused by all three convs.
    masks = [mask_ref[k:k + 1, :] for k in range(9)]

    def conv3x3_relu(slab, cin, w_ref, b_ref):
        # slab: (cin, P) activation, channels on sublanes, flattened (n, y, x)
        # on lanes.  Build im2col^T = (9*cin, P) with lane rolls (XLU) + border
        # masks (VPU), then ONE MXU matmul (cop, 9*cin) @ (9*cin, P).
        for k in range(9):
            if shifts[k] == 0:
                tap = slab                    # centre tap: mask is all-ones
            else:
                tap = pltpu.roll(slab, shifts[k], axis=1) * masks[k]
            col_ref[k * cin:(k + 1) * cin, :] = tap   # 8-aligned sublane write
        acc = jnp.dot(w_ref[...], col_ref[0:9 * cin, :],
                      preferred_element_type=jnp.float32)        # (cop, P)
        return jnp.maximum(acc + b_ref[...], 0.0)

    h = conv3x3_relu(xp_ref[...], cip, w1_ref, b1_ref)
    h = conv3x3_relu(h, cop, w2_ref, b2_ref)
    h = conv3x3_relu(h, cop, w3_ref, b3_ref)

    # Residual add + per-sample domain-label select (label == 0 -> keep x2).
    out_ref[...] = x2_ref[...] + keep_ref[...] * h


def _pick_block_batch(B, S, cip, cop, vmem_budget_bytes=20 << 20):
    """Largest per-step sample count whose working set fits the VMEM budget.

    The 20 MiB budget keeps us under the default 32 MiB scoped VMEM limit (and
    comfortably inside v7x's 64 MiB physical VMEM) so double-buffering and DMA
    overlap survive.  If the budget is raised, also raise
    CompilerParams(vmem_limit_bytes=...).  A block's lane extent must be a
    multiple of 128 (or the whole batch) to keep stores unmasked.
    """
    cmax = max(cip, cop)
    for nb in range(B, 0, -1):
        if B % nb:
            continue
        P = nb * S
        if nb != B and P % 128 != 0:
            continue
        est = 4 * (2 * (cip + 2 * cop + 1) * P      # double-buffered blocks
                   + 9 * cmax * P                   # col scratch
                   + 9 * P                          # tap masks
                   + 3 * cop * (9 * cmax + 1))      # weights + biases
        if est <= vmem_budget_bytes:
            return nb
    return 1


def rfrb_forward(x1, x2, labels, params):
    """x1: (B, Ci, H, W) NCHW; x2: (B, Co, H//2, W//2) NCHW; labels: (B,)."""
    w1, b1, w2, b2, w3, b3 = params          # weights in HWIO: (3, 3, Cin, Cout)
    B, Ci, H, W = x1.shape
    Co = w1.shape[-1]
    assert H % 2 == 0 and W % 2 == 0, "MaxPool2d(2,2) path assumes even H, W"
    Hh, Wh = H // 2, W // 2
    S = Hh * Wh
    Cip, Cop = _round_up(Ci, 8), _round_up(Co, 8)   # sublane-aligned channels

    # ---- wrapper-side layout prep (all ops on <= half-resolution tensors) ----
    # MaxPool2d(2,2) as one fused XLA reshape+max on NCHW.
    # TODO(synk): fold the pool into the kernel once x1 can be fed in the
    #             lane-dense layout without a full-resolution transpose.
    pooled = jnp.max(x1.astype(jnp.float32).reshape(B, Ci, Hh, 2, Wh, 2),
                     axis=(3, 5))                              # (B, Ci, Hh, Wh)
    # Channels on sublanes, flattened (sample, y, x) on lanes.
    xp = jnp.transpose(pooled, (1, 0, 2, 3)).reshape(Ci, B * S)
    xp = jnp.pad(xp, ((0, Cip - Ci), (0, 0)))
    x2t = jnp.transpose(x2.astype(jnp.float32), (1, 0, 2, 3)).reshape(Co, B * S)
    x2t = jnp.pad(x2t, ((0, Cop - Co), (0, 0)))

    # Weights: HWIO (3,3,cin,co) -> zero-pad channels to multiples of 8 ->
    # (co_p, 9*cin_p); rows ordered (dy, dx, c) with c fastest, matching the
    # in-kernel col layout.  Padded rows/cols are zero -> results unchanged.
    def prep_w(w, cin_p, co_p):
        w = jnp.pad(w.astype(jnp.float32),
                    ((0, 0), (0, 0),
                     (0, cin_p - w.shape[2]), (0, co_p - w.shape[3])))
        return jnp.transpose(w.reshape(9 * cin_p, co_p))       # (co_p, 9*cin_p)

    def prep_b(b, co_p):
        return jnp.pad(b.astype(jnp.float32),
                       (0, co_p - b.shape[0])).reshape(co_p, 1)

    w1t, w2t, w3t = prep_w(w1, Cip, Cop), prep_w(w2, Cop, Cop), prep_w(w3, Cop, Cop)
    b1t, b2t, b3t = prep_b(b1, Cop), prep_b(b2, Cop), prep_b(b3, Cop)

    # Per-sample label select as a per-lane keep mask (label==0 -> x2 only).
    keep = jnp.repeat((labels != 0).astype(jnp.float32), S).reshape(1, B * S)

    # Block of nB samples per grid step; lane extent P = nB*S.
    nB = _pick_block_batch(B, S, Cip, Cop)
    P = nB * S
    grid = (B // nB,)

    # Static lane-roll amounts and border-validity masks for the 9 conv taps.
    # roll(x, s)[p] == x[p - s], so to read the neighbour at p + off we use
    # s = (-off) % P; positions whose neighbour is outside the image (or would
    # wrap across a sample boundary) are zeroed by the mask == zero padding.
    q = jnp.arange(P)
    yy0 = (q % S) // Wh
    xx0 = q % Wh
    shifts, taps = [], []
    for dy in range(3):
        for dx in range(3):
            off = (dy - 1) * Wh + (dx - 1)
            shifts.append((-off) % P)
            yy = yy0 + (dy - 1)
            xx = xx0 + (dx - 1)
            taps.append(((yy >= 0) & (yy < Hh) & (xx >= 0) & (xx < Wh))
                        .astype(jnp.float32))
    tap_mask = jnp.stack(taps, axis=0)                          # (9, P)

    kern = functools.partial(_rfrb_kernel, tuple(shifts), Cip, Cop)

    def lane_spec(rows):
        return pl.BlockSpec((rows, P), lambda i: (0, i))

    def full_spec(shape):
        nd = len(shape)
        return pl.BlockSpec(shape, lambda i, nd=nd: (0,) * nd)

    out_t = pl.pallas_call(
        kern,
        out_shape=jax.ShapeDtypeStruct((Cop, B * S), jnp.float32),
        grid_spec=pltpu.PrefetchScalarGridSpec(
            num_scalar_prefetch=0,
            grid=grid,
            in_specs=[lane_spec(Cip),                 # pooled x1 slab
                      lane_spec(Cop),                 # x2 slab
                      lane_spec(1),                   # keep mask
                      full_spec((9, P)),              # tap masks (same per block)
                      full_spec(w1t.shape), full_spec(b1t.shape),
                      full_spec(w2t.shape), full_spec(b2t.shape),
                      full_spec(w3t.shape), full_spec(b3t.shape)],
            out_specs=pl.BlockSpec((Cop, P), lambda i: (0, i)),
            scratch_shapes=[pltpu.VMEM((9 * max(Cip, Cop), P), jnp.float32)]),
        # Blocks are independent and uniform work -> shard across TCs on v7x;
        # _pick_block_batch keeps the working set under the default 32 MiB
        # scoped VMEM limit, so no vmem_limit_bytes override is needed here.
        compiler_params=pltpu.CompilerParams(dimension_semantics=("parallel",)),
    )(xp, x2t, keep, tap_mask, w1t, b1t, w2t, b2t, w3t, b3t)

    out = out_t[:Co].reshape(Co, B, Hh, Wh)
    return jnp.transpose(out, (1, 0, 2, 3))            # NCHW (B, Co, Hh, Wh)


def rfrb_reference(x1, x2, labels, params):
    """Pure-JAX reference mirroring the PyTorch forward."""
    w1, b1, w2, b2, w3, b3 = params
    x1n = jnp.transpose(x1, (0, 2, 3, 1)).astype(jnp.float32)
    x2n = jnp.transpose(x2, (0, 2, 3, 1)).astype(jnp.float32)
    pooled = lax.reduce_window(x1n, -jnp.inf, lax.max,
                               (1, 2, 2, 1), (1, 2, 2, 1), 'VALID')
    dn = ('NHWC', 'HWIO', 'NHWC')
    h = pooled
    for w, bb in ((w1, b1), (w2, b2), (w3, b3)):
        h = lax.conv_general_dilated(h, w, (1, 1), 'SAME', dimension_numbers=dn,
                                     precision=lax.Precision.HIGHEST)
        h = jnp.maximum(h + bb, 0.0)
    out = x2n + h
    mask = (labels == 0)[:, None, None, None]
    out = jnp.where(mask, x2n, out)
    return jnp.transpose(out, (0, 3, 1, 2))


if __name__ == "__main__":
    key = jax.random.PRNGKey(0)
    B, Ci, Co, H, W = 2, 4, 8, 16, 16
    ks = jax.random.split(key, 8)

    x1 = jax.random.normal(ks[0], (B, Ci, H, W), jnp.float32)
    x2 = jax.random.normal(ks[1], (B, Co, H // 2, W // 2), jnp.float32)
    # per-sample domain labels (0 -> keep x2; 1 -> residual branch applied)
    domain_labels = jnp.array([0, 1], dtype=jnp.int32)

    def init_w(k, shape, fan_in):
        return jax.random.normal(k, shape, jnp.float32) / jnp.sqrt(fan_in)

    w1 = init_w(ks[2], (3, 3, Ci, Co), 9 * Ci)          # HWIO
    b1 = 0.01 * jax.random.normal(ks[3], (Co,), jnp.float32)
    w2 = init_w(ks[4], (3, 3, Co, Co), 9 * Co)
    b2 = 0.01 * jax.random.normal(ks[5], (Co,), jnp.float32)
    w3 = init_w(ks[6], (3, 3, Co, Co), 9 * Co)
    b3 = 0.01 * jax.random.normal(ks[7], (Co,), jnp.float32)
    params = (w1, b1, w2, b2, w3, b3)

    out = jax.block_until_ready(rfrb_forward(x1, x2, domain_labels, params))
    ref = jax.block_until_ready(rfrb_reference(x1, x2, domain_labels, params))

    assert out.shape == (B, Co, H // 2, W // 2), out.shape
    assert jnp.allclose(out, ref, atol=1e-4, rtol=1e-4), \
        float(jnp.max(jnp.abs(out - ref)))
    print("KERNEL_OK")
</pallas_src>

<mosaic_0001>
module attributes {stable_mosaic.version = 11 : i64} {
  func.func @_rfrb_kernel(%arg0: i32, %arg1: memref<8x128xf32, #tpu.memory_space<vmem>>, %arg2: memref<8x128xf32, #tpu.memory_space<vmem>>, %arg3: memref<1x128xf32, #tpu.memory_space<vmem>>, %arg4: memref<9x128xf32, #tpu.memory_space<vmem>>, %arg5: memref<8x72xf32, #tpu.memory_space<vmem>>, %arg6: memref<8x1xf32, #tpu.memory_space<vmem>>, %arg7: memref<8x72xf32, #tpu.memory_space<vmem>>, %arg8: memref<8x1xf32, #tpu.memory_space<vmem>>, %arg9: memref<8x72xf32, #tpu.memory_space<vmem>>, %arg10: memref<8x1xf32, #tpu.memory_space<vmem>>, %arg11: memref<8x128xf32, #tpu.memory_space<vmem>>, %arg12: memref<72x128xf32, #tpu.memory_space<vmem>>) attributes {dimension_semantics = [#tpu.dimension_semantics<parallel>], iteration_bounds = array<i64: 1>, scalar_prefetch = 0 : i64, scratch_operands = 1 : i64, tpu.core_type = #tpu.core_type<tc>, window_params = [{transform_indices = @transform_0, window_bounds = array<i64: 8, 128>}, {transform_indices = @transform_1, window_bounds = array<i64: 8, 128>}, {transform_indices = @transform_2, window_bounds = array<i64: 1, 128>}, {pipeline_mode = #tpu.pipeline_mode<synchronous>, transform_indices = @transform_3, window_bounds = array<i64: 9, 128>}, {pipeline_mode = #tpu.pipeline_mode<synchronous>, transform_indices = @transform_4, window_bounds = array<i64: 8, 72>}, {pipeline_mode = #tpu.pipeline_mode<synchronous>, transform_indices = @transform_5, window_bounds = array<i64: 8, 1>}, {pipeline_mode = #tpu.pipeline_mode<synchronous>, transform_indices = @transform_6, window_bounds = array<i64: 8, 72>}, {pipeline_mode = #tpu.pipeline_mode<synchronous>, transform_indices = @transform_7, window_bounds = array<i64: 8, 1>}, {pipeline_mode = #tpu.pipeline_mode<synchronous>, transform_indices = @transform_8, window_bounds = array<i64: 8, 72>}, {pipeline_mode = #tpu.pipeline_mode<synchronous>, transform_indices = @transform_9, window_bounds = array<i64: 8, 1>}, {transform_indices = @transform_10, window_bounds = array<i64: 8, 128>}]} {
    %c0 = arith.constant 0 : index
    %c0_0 = arith.constant 0 : index
    %0 = vector.load %arg4[%c0, %c0_0] : memref<9x128xf32, #tpu.memory_space<vmem>>, vector<1x128xf32>
    %c1 = arith.constant 1 : index
    %c0_1 = arith.constant 0 : index
    %1 = vector.load %arg4[%c1, %c0_1] : memref<9x128xf32, #tpu.memory_space<vmem>>, vector<1x128xf32>
    %c2 = arith.constant 2 : index
    %c0_2 = arith.constant 0 : index
    %2 = vector.load %arg4[%c2, %c0_2] : memref<9x128xf32, #tpu.memory_space<vmem>>, vector<1x128xf32>
    %c3 = arith.constant 3 : index
    %c0_3 = arith.constant 0 : index
    %3 = vector.load %arg4[%c3, %c0_3] : memref<9x128xf32, #tpu.memory_space<vmem>>, vector<1x128xf32>
    %c5 = arith.constant 5 : index
    %c0_4 = arith.constant 0 : index
    %4 = vector.load %arg4[%c5, %c0_4] : memref<9x128xf32, #tpu.memory_space<vmem>>, vector<1x128xf32>
    %c6 = arith.constant 6 : index
    %c0_5 = arith.constant 0 : index
    %5 = vector.load %arg4[%c6, %c0_5] : memref<9x128xf32, #tpu.memory_space<vmem>>, vector<1x128xf32>
    %c7 = arith.constant 7 : index
    %c0_6 = arith.constant 0 : index
    %6 = vector.load %arg4[%c7, %c0_6] : memref<9x128xf32, #tpu.memory_space<vmem>>, vector<1x128xf32>
    %c8 = arith.constant 8 : index
    %c0_7 = arith.constant 0 : index
    %7 = vector.load %arg4[%c8, %c0_7] : memref<9x128xf32, #tpu.memory_space<vmem>>, vector<1x128xf32>
    %c0_8 = arith.constant 0 : index
    %c0_9 = arith.constant 0 : index
    %8 = vector.load %arg1[%c0_8, %c0_9] : memref<8x128xf32, #tpu.memory_space<vmem>>, vector<8x128xf32>
    %c9_i32 = arith.constant 9 : i32
    %9 = tpu.dynamic_rotate %8 by %c9_i32 dim 1 : vector<8x128xf32>, i32 -> vector<8x128xf32>
    %10 = vector.broadcast %0 : vector<1x128xf32> to vector<8x128xf32>
    %11 = arith.mulf %9, %10 : vector<8x128xf32>
    %c0_10 = arith.constant 0 : index
    %c0_11 = arith.constant 0 : index
    %12 = vector.load %arg12[%c0_10, %c0_11] : memref<72x128xf32, #tpu.memory_space<vmem>>, vector<8x128xf32>
    tpu.vector_store %arg12[%c0_10, %c0_11], %11 {strides = array<i32>} : memref<72x128xf32, #tpu.memory_space<vmem>>, vector<8x128xf32>,
    %c8_i32 = arith.constant 8 : i32
    %13 = tpu.dynamic_rotate %8 by %c8_i32 dim 1 : vector<8x128xf32>, i32 -> vector<8x128xf32>
    %14 = vector.broadcast %1 : vector<1x128xf32> to vector<8x128xf32>
    %15 = arith.mulf %13, %14 : vector<8x128xf32>
    %c8_12 = arith.constant 8 : index
    %c0_13 = arith.constant 0 : index
    %16 = vector.load %arg12[%c8_12, %c0_13] : memref<72x128xf32, #tpu.memory_space<vmem>>, vector<8x128xf32>
    tpu.vector_store %arg12[%c8_12, %c0_13], %15 {strides = array<i32>} : memref<72x128xf32, #tpu.memory_space<vmem>>, vector<8x128xf32>,
    %c7_i32 = arith.constant 7 : i32
    %17 = tpu.dynamic_rotate %8 by %c7_i32 dim 1 : vector<8x128xf32>, i32 -> vector<8x128xf32>
    %18 = vector.broadcast %2 : vector<1x128xf32> to vector<8x128xf32>
    %19 = arith.mulf %17, %18 : vector<8x128xf32>
    %c16 = arith.constant 16 : index
    %c0_14 = arith.constant 0 : index
    %20 = vector.load %arg12[%c16, %c0_14] : memref<72x128xf32, #tpu.memory_space<vmem>>, vector<8x128xf32>
    tpu.vector_store %arg12[%c16, %c0_14], %19 {strides = array<i32>} : memref<72x128xf32, #tpu.memory_space<vmem>>, vector<8x128xf32>,
    %c1_i32 = arith.constant 1 : i32
    %21 = tpu.dynamic_rotate %8 by %c1_i32 dim 1 : vector<8x128xf32>, i32 -> vector<8x128xf32>
    %22 = vector.broadcast %3 : vector<1x128xf32> to vector<8x128xf32>
    %23 = arith.mulf %21, %22 : vector<8x128xf32>
    %c24 = arith.constant 24 : index
    %c0_15 = arith.constant 0 : index
    %24 = vector.load %arg12[%c24, %c0_15] : memref<72x128xf32, #tpu.memory_space<vmem>>, vector<8x128xf32>
    tpu.vector_store %arg12[%c24, %c0_15], %23 {strides = array<i32>} : memref<72x128xf32, #tpu.memory_space<vmem>>, vector<8x128xf32>,
    %c32 = arith.constant 32 : index
    %c0_16 = arith.constant 0 : index
    %25 = vector.load %arg12[%c32, %c0_16] : memref<72x128xf32, #tpu.memory_space<vmem>>, vector<8x128xf32>
    tpu.vector_store %arg12[%c32, %c0_16], %8 {strides = array<i32>} : memref<72x128xf32, #tpu.memory_space<vmem>>, vector<8x128xf32>,
    %c127_i32 = arith.constant 127 : i32
    %26 = tpu.dynamic_rotate %8 by %c127_i32 dim 1 : vector<8x128xf32>, i32 -> vector<8x128xf32>
    %27 = vector.broadcast %4 : vector<1x128xf32> to vector<8x128xf32>
    %28 = arith.mulf %26, %27 : vector<8x128xf32>
    %c40 = arith.constant 40 : index
    %c0_17 = arith.constant 0 : index
    %29 = vector.load %arg12[%c40, %c0_17] : memref<72x128xf32, #tpu.memory_space<vmem>>, vector<8x128xf32>
    tpu.vector_store %arg12[%c40, %c0_17], %28 {strides = array<i32>} : memref<72x128xf32, #tpu.memory_space<vmem>>, vector<8x128xf32>,
    %c121_i32 = arith.constant 121 : i32
    %30 = tpu.dynamic_rotate %8 by %c121_i32 dim 1 : vector<8x128xf32>, i32 -> vector<8x128xf32>
    %31 = vector.broadcast %5 : vector<1x128xf32> to vector<8x128xf32>
    %32 = arith.mulf %30, %31 : vector<8x128xf32>
    %c48 = arith.constant 48 : index
    %c0_18 = arith.constant 0 : index
    %33 = vector.load %arg12[%c48, %c0_18] : memref<72x128xf32, #tpu.memory_space<vmem>>, vector<8x128xf32>
    tpu.vector_store %arg12[%c48, %c0_18], %32 {strides = array<i32>} : memref<72x128xf32, #tpu.memory_space<vmem>>, vector<8x128xf32>,
    %c120_i32 = arith.constant 120 : i32
    %34 = tpu.dynamic_rotate %8 by %c120_i32 dim 1 : vector<8x128xf32>, i32 -> vector<8x128xf32>
    %35 = vector.broadcast %6 : vector<1x128xf32> to vector<8x128xf32>
    %36 = arith.mulf %34, %35 : vector<8x128xf32>
    %c56 = arith.constant 56 : index
    %c0_19 = arith.constant 0 : index
    %37 = vector.load %arg12[%c56, %c0_19] : memref<72x128xf32, #tpu.memory_space<vmem>>, vector<8x128xf32>
    tpu.vector_store %arg12[%c56, %c0_19], %36 {strides = array<i32>} : memref<72x128xf32, #tpu.memory_space<vmem>>, vector<8x128xf32>,
    %c119_i32 = arith.constant 119 : i32
    %38 = tpu.dynamic_rotate %8 by %c119_i32 dim 1 : vector<8x128xf32>, i32 -> vector<8x128xf32>
    %39 = vector.broadcast %7 : vector<1x128xf32> to vector<8x128xf32>
    %40 = arith.mulf %38, %39 : vector<8x128xf32>
    %c64 = arith.constant 64 : index
    %c0_20 = arith.constant 0 : index
    %41 = vector.load %arg12[%c64, %c0_20] : memref<72x128xf32, #tpu.memory_space<vmem>>, vector<8x128xf32>
    tpu.vector_store %arg12[%c64, %c0_20], %40 {strides = array<i32>} : memref<72x128xf32, #tpu.memory_space<vmem>>, vector<8x128xf32>,
    %c0_21 = arith.constant 0 : index
    %c0_22 = arith.constant 0 : index
    %42 = vector.load %arg5[%c0_21, %c0_22] : memref<8x72xf32, #tpu.memory_space<vmem>>, vector<8x72xf32>
    %c0_23 = arith.constant 0 : index
    %c0_24 = arith.constant 0 : index
    %43 = vector.load %arg12[%c0_23, %c0_24] : memref<72x128xf32, #tpu.memory_space<vmem>>, vector<72x128xf32>
    %cst = arith.constant dense<0.000000e+00> : vector<8x128xf32>
    %44 = tpu.matmul %42, %43, %cst {dimension_numbers = #tpu.dot_dimension_numbers<[1], [0], [0], [1], [0, 0, 1, 1], [], []>} : vector<8x72xf32>, vector<72x128xf32>, vector<8x128xf32> -> vector<8x128xf32>
    %c0_25 = arith.constant 0 : index
    %c0_26 = arith.constant 0 : index
    %45 = vector.load %arg6[%c0_25, %c0_26] : memref<8x1xf32, #tpu.memory_space<vmem>>, vector<8x1xf32>
    %46 = vector.broadcast %45 : vector<8x1xf32> to vector<8x128xf32>
    %47 = arith.addf %44, %46 : vector<8x128xf32>
    %cst_27 = arith.constant 0.000000e+00 : f32
    %48 = vector.broadcast %cst_27 : f32 to vector<8x128xf32>
    %49 = arith.maximumf %47, %48 : vector<8x128xf32>
    %c9_i32_28 = arith.constant 9 : i32
    %50 = tpu.dynamic_rotate %49 by %c9_i32_28 dim 1 : vector<8x128xf32>, i32 -> vector<8x128xf32>
    %51 = vector.broadcast %0 : vector<1x128xf32> to vector<8x128xf32>
    %52 = arith.mulf %50, %51 : vector<8x128xf32>
    %c0_29 = arith.constant 0 : index
    %c0_30 = arith.constant 0 : index
    %53 = vector.load %arg12[%c0_29, %c0_30] : memref<72x128xf32, #tpu.memory_space<vmem>>, vector<8x128xf32>
    tpu.vector_store %arg12[%c0_29, %c0_30], %52 {strides = array<i32>} : memref<72x128xf32, #tpu.memory_space<vmem>>, vector<8x128xf32>,
    %c8_i32_31 = arith.constant 8 : i32
    %54 = tpu.dynamic_rotate %49 by %c8_i32_31 dim 1 : vector<8x128xf32>, i32 -> vector<8x128xf32>
    %55 = vector.broadcast %1 : vector<1x128xf32> to vector<8x128xf32>
    %56 = arith.mulf %54, %55 : vector<8x128xf32>
    %c8_32 = arith.constant 8 : index
    %c0_33 = arith.constant 0 : index
    %57 = vector.load %arg12[%c8_32, %c0_33] : memref<72x128xf32, #tpu.memory_space<vmem>>, vector<8x128xf32>
    tpu.vector_store %arg12[%c8_32, %c0_33], %56 {strides = array<i32>} : memref<72x128xf32, #tpu.memory_space<vmem>>, vector<8x128xf32>,
    %c7_i32_34 = arith.constant 7 : i32
    %58 = tpu.dynamic_rotate %49 by %c7_i32_34 dim 1 : vector<8x128xf32>, i32 -> vector<8x128xf32>
    %59 = vector.broadcast %2 : vector<1x128xf32> to vector<8x128xf32>
    %60 = arith.mulf %58, %59 : vector<8x128xf32>
    %c16_35 = arith.constant 16 : index
    %c0_36 = arith.constant 0 : index
    %61 = vector.load %arg12[%c16_35, %c0_36] : memref<72x128xf32, #tpu.memory_space<vmem>>, vector<8x128xf32>
    tpu.vector_store %arg12[%c16_35, %c0_36], %60 {strides = array<i32>} : memref<72x128xf32, #tpu.memory_space<vmem>>, vector<8x128xf32>,
    %c1_i32_37 = arith.constant 1 : i32
    %62 = tpu.dynamic_rotate %49 by %c1_i32_37 dim 1 : vector<8x128xf32>, i32 -> vector<8x128xf32>
    %63 = vector.broadcast %3 : vector<1x128xf32> to vector<8x128xf32>
    %64 = arith.mulf %62, %63 : vector<8x128xf32>
    %c24_38 = arith.constant 24 : index
    %c0_39 = arith.constant 0 : index
    %65 = vector.load %arg12[%c24_38, %c0_39] : memref<72x128xf32, #tpu.memory_space<vmem>>, vector<8x128xf32>
    tpu.vector_store %arg12[%c24_38, %c0_39], %64 {strides = array<i32>} : memref<72x128xf32, #tpu.memory_space<vmem>>, vector<8x128xf32>,
    %c32_40 = arith.constant 32 : index
    %c0_41 = arith.constant 0 : index
    %66 = vector.load %arg12[%c32_40, %c0_41] : memref<72x128xf32, #tpu.memory_space<vmem>>, vector<8x128xf32>
    tpu.vector_store %arg12[%c32_40, %c0_41], %49 {strides = array<i32>} : memref<72x128xf32, #tpu.memory_space<vmem>>, vector<8x128xf32>,
    %c127_i32_42 = arith.constant 127 : i32
    %67 = tpu.dynamic_rotate %49 by %c127_i32_42 dim 1 : vector<8x128xf32>, i32 -> vector<8x128xf32>
    %68 = vector.broadcast %4 : vector<1x128xf32> to vector<8x128xf32>
    %69 = arith.mulf %67, %68 : vector<8x128xf32>
    %c40_43 = arith.constant 40 : index
    %c0_44 = arith.constant 0 : index
    %70 = vector.load %arg12[%c40_43, %c0_44] : memref<72x128xf32, #tpu.memory_space<vmem>>, vector<8x128xf32>
    tpu.vector_store %arg12[%c40_43, %c0_44], %69 {strides = array<i32>} : memref<72x128xf32, #tpu.memory_space<vmem>>, vector<8x128xf32>,
    %c121_i32_45 = arith.constant 121 : i32
    %71 = tpu.dynamic_rotate %49 by %c121_i32_45 dim 1 : vector<8x128xf32>, i32 -> vector<8x128xf32>
    %72 = vector.broadcast %5 : vector<1x128xf32> to vector<8x128xf32>
    %73 = arith.mulf %71, %72 : vector<8x128xf32>
    %c48_46 = arith.constant 48 : index
    %c0_47 = arith.constant 0 : index
    %74 = vector.load %arg12[%c48_46, %c0_47] : memref<72x128xf32, #tpu.memory_space<vmem>>, vector<8x128xf32>
    tpu.vector_store %arg12[%c48_46, %c0_47], %73 {strides = array<i32>} : memref<72x128xf32, #tpu.memory_space<vmem>>, vector<8x128xf32>,
    %c120_i32_48 = arith.constant 120 : i32
    %75 = tpu.dynamic_rotate %49 by %c120_i32_48 dim 1 : vector<8x128xf32>, i32 -> vector<8x128xf32>
    %76 = vector.broadcast %6 : vector<1x128xf32> to vector<8x128xf32>
    %77 = arith.mulf %75, %76 : vector<8x128xf32>
    %c56_49 = arith.constant 56 : index
    %c0_50 = arith.constant 0 : index
    %78 = vector.load %arg12[%c56_49, %c0_50] : memref<72x128xf32, #tpu.memory_space<vmem>>, vector<8x128xf32>
    tpu.vector_store %arg12[%c56_49, %c0_50], %77 {strides = array<i32>} : memref<72x128xf32, #tpu.memory_space<vmem>>, vector<8x128xf32>,
    %c119_i32_51 = arith.constant 119 : i32
    %79 = tpu.dynamic_rotate %49 by %c119_i32_51 dim 1 : vector<8x128xf32>, i32 -> vector<8x128xf32>
    %80 = vector.broadcast %7 : vector<1x128xf32> to vector<8x128xf32>
    %81 = arith.mulf %79, %80 : vector<8x128xf32>
    %c64_52 = arith.constant 64 : index
    %c0_53 = arith.constant 0 : index
    %82 = vector.load %arg12[%c64_52, %c0_53] : memref<72x128xf32, #tpu.memory_space<vmem>>, vector<8x128xf32>
    tpu.vector_store %arg12[%c64_52, %c0_53], %81 {strides = array<i32>} : memref<72x128xf32, #tpu.memory_space<vmem>>, vector<8x128xf32>,
    %c0_54 = arith.constant 0 : index
    %c0_55 = arith.constant 0 : index
    %83 = vector.load %arg7[%c0_54, %c0_55] : memref<8x72xf32, #tpu.memory_space<vmem>>, vector<8x72xf32>
    %c0_56 = arith.constant 0 : index
    %c0_57 = arith.constant 0 : index
    %84 = vector.load %arg12[%c0_56, %c0_57] : memref<72x128xf32, #tpu.memory_space<vmem>>, vector<72x128xf32>
    %cst_58 = arith.constant dense<0.000000e+00> : vector<8x128xf32>
    %85 = tpu.matmul %83, %84, %cst_58 {dimension_numbers = #tpu.dot_dimension_numbers<[1], [0], [0], [1], [0, 0, 1, 1], [], []>} : vector<8x72xf32>, vector<72x128xf32>, vector<8x128xf32> -> vector<8x128xf32>
    %c0_59 = arith.constant 0 : index
    %c0_60 = arith.constant 0 : index
    %86 = vector.load %arg8[%c0_59, %c0_60] : memref<8x1xf32, #tpu.memory_space<vmem>>, vector<8x1xf32>
    %87 = vector.broadcast %86 : vector<8x1xf32> to vector<8x128xf32>
    %88 = arith.addf %85, %87 : vector<8x128xf32>
    %cst_61 = arith.constant 0.000000e+00 : f32
    %89 = vector.broadcast %cst_61 : f32 to vector<8x128xf32>
    %90 = arith.maximumf %88, %89 : vector<8x128xf32>
    %c9_i32_62 = arith.constant 9 : i32
    %91 = tpu.dynamic_rotate %90 by %c9_i32_62 dim 1 : vector<8x128xf32>, i32 -> vector<8x128xf32>
    %92 = vector.broadcast %0 : vector<1x128xf32> to vector<8x128xf32>
    %93 = arith.mulf %91, %92 : vector<8x128xf32>
    %c0_63 = arith.constant 0 : index
    %c0_64 = arith.constant 0 : index
    %94 = vector.load %arg12[%c0_63, %c0_64] : memref<72x128xf32, #tpu.memory_space<vmem>>, vector<8x128xf32>
    tpu.vector_store %arg12[%c0_63, %c0_64], %93 {strides = array<i32>} : memref<72x128xf32, #tpu.memory_space<vmem>>, vector<8x128xf32>,
    %c8_i32_65 = arith.constant 8 : i32
    %95 = tpu.dynamic_rotate %90 by %c8_i32_65 dim 1 : vector<8x128xf32>, i32 -> vector<8x128xf32>
    %96 = vector.broadcast %1 : vector<1x128xf32> to vector<8x128xf32>
    %97 = arith.mulf %95, %96 : vector<8x128xf32>
    %c8_66 = arith.constant 8 : index
    %c0_67 = arith.constant 0 : index
    %98 = vector.load %arg12[%c8_66, %c0_67] : memref<72x128xf32, #tpu.memory_space<vmem>>, vector<8x128xf32>
    tpu.vector_store %arg12[%c8_66, %c0_67], %97 {strides = array<i32>} : memref<72x128xf32, #tpu.memory_space<vmem>>, vector<8x128xf32>,
    %c7_i32_68 = arith.constant 7 : i32
    %99 = tpu.dynamic_rotate %90 by %c7_i32_68 dim 1 : vector<8x128xf32>, i32 -> vector<8x128xf32>
    %100 = vector.broadcast %2 : vector<1x128xf32> to vector<8x128xf32>
    %101 = arith.mulf %99, %100 : vector<8x128xf32>
    %c16_69 = arith.constant 16 : index
    %c0_70 = arith.constant 0 : index
    %102 = vector.load %arg12[%c16_69, %c0_70] : memref<72x128xf32, #tpu.memory_space<vmem>>, vector<8x128xf32>
    tpu.vector_store %arg12[%c16_69, %c0_70], %101 {strides = array<i32>} : memref<72x128xf32, #tpu.memory_space<vmem>>, vector<8x128xf32>,
    %c1_i32_71 = arith.constant 1 : i32
    %103 = tpu.dynamic_rotate %90 by %c1_i32_71 dim 1 : vector<8x128xf32>, i32 -> vector<8x128xf32>
    %104 = vector.broadcast %3 : vector<1x128xf32> to vector<8x128xf32>
    %105 = arith.mulf %103, %104 : vector<8x128xf32>
    %c24_72 = arith.constant 24 : index
    %c0_73 = arith.constant 0 : index
    %106 = vector.load %arg12[%c24_72, %c0_73] : memref<72x128xf32, #tpu.memory_space<vmem>>, vector<8x128xf32>
    tpu.vector_store %arg12[%c24_72, %c0_73], %105 {strides = array<i32>} : memref<72x128xf32, #tpu.memory_space<vmem>>, vector<8x128xf32>,
    %c32_74 = arith.constant 32 : index
    %c0_75 = arith.constant 0 : index
    %107 = vector.load %arg12[%c32_74, %c0_75] : memref<72x128xf32, #tpu.memory_space<vmem>>, vector<8x128xf32>
    tpu.vector_store %arg12[%c32_74, %c0_75], %90 {strides = array<i32>} : memref<72x128xf32, #tpu.memory_space<vmem>>, vector<8x128xf32>,
    %c127_i32_76 = arith.constant 127 : i32
    %108 = tpu.dynamic_rotate %90 by %c127_i32_76 dim 1 : vector<8x128xf32>, i32 -> vector<8x128xf32>
    %109 = vector.broadcast %4 : vector<1x128xf32> to vector<8x128xf32>
    %110 = arith.mulf %108, %109 : vector<8x128xf32>
    %c40_77 = arith.constant 40 : index
    %c0_78 = arith.constant 0 : index
    %111 = vector.load %arg12[%c40_77, %c0_78] : memref<72x128xf32, #tpu.memory_space<vmem>>, vector<8x128xf32>
    tpu.vector_store %arg12[%c40_77, %c0_78], %110 {strides = array<i32>} : memref<72x128xf32, #tpu.memory_space<vmem>>, vector<8x128xf32>,
    %c121_i32_79 = arith.constant 121 : i32
    %112 = tpu.dynamic_rotate %90 by %c121_i32_79 dim 1 : vector<8x128xf32>, i32 -> vector<8x128xf32>
    %113 = vector.broadcast %5 : vector<1x128xf32> to vector<8x128xf32>
    %114 = arith.mulf %112, %113 : vector<8x128xf32>
    %c48_80 = arith.constant 48 : index
    %c0_81 = arith.constant 0 : index
    %115 = vector.load %arg12[%c48_80, %c0_81] : memref<72x128xf32, #tpu.memory_space<vmem>>, vector<8x128xf32>
    tpu.vector_store %arg12[%c48_80, %c0_81], %114 {strides = array<i32>} : memref<72x128xf32, #tpu.memory_space<vmem>>, vector<8x128xf32>,
    %c120_i32_82 = arith.constant 120 : i32
    %116 = tpu.dynamic_rotate %90 by %c120_i32_82 dim 1 : vector<8x128xf32>, i32 -> vector<8x128xf32>
    %117 = vector.broadcast %6 : vector<1x128xf32> to vector<8x128xf32>
    %118 = arith.mulf %116, %117 : vector<8x128xf32>
    %c56_83 = arith.constant 56 : index
    %c0_84 = arith.constant 0 : index
    %119 = vector.load %arg12[%c56_83, %c0_84] : memref<72x128xf32, #tpu.memory_space<vmem>>, vector<8x128xf32>
    tpu.vector_store %arg12[%c56_83, %c0_84], %118 {strides = array<i32>} : memref<72x128xf32, #tpu.memory_space<vmem>>, vector<8x128xf32>,
    %c119_i32_85 = arith.constant 119 : i32
    %120 = tpu.dynamic_rotate %90 by %c119_i32_85 dim 1 : vector<8x128xf32>, i32 -> vector<8x128xf32>
    %121 = vector.broadcast %7 : vector<1x128xf32> to vector<8x128xf32>
    %122 = arith.mulf %120, %121 : vector<8x128xf32>
    %c64_86 = arith.constant 64 : index
    %c0_87 = arith.constant 0 : index
    %123 = vector.load %arg12[%c64_86, %c0_87] : memref<72x128xf32, #tpu.memory_space<vmem>>, vector<8x128xf32>
    tpu.vector_store %arg12[%c64_86, %c0_87], %122 {strides = array<i32>} : memref<72x128xf32, #tpu.memory_space<vmem>>, vector<8x128xf32>,
    %c0_88 = arith.constant 0 : index
    %c0_89 = arith.constant 0 : index
    %124 = vector.load %arg9[%c0_88, %c0_89] : memref<8x72xf32, #tpu.memory_space<vmem>>, vector<8x72xf32>
    %c0_90 = arith.constant 0 : index
    %c0_91 = arith.constant 0 : index
    %125 = vector.load %arg12[%c0_90, %c0_91] : memref<72x128xf32, #tpu.memory_space<vmem>>, vector<72x128xf32>
    %cst_92 = arith.constant dense<0.000000e+00> : vector<8x128xf32>
    %126 = tpu.matmul %124, %125, %cst_92 {dimension_numbers = #tpu.dot_dimension_numbers<[1], [0], [0], [1], [0, 0, 1, 1], [], []>} : vector<8x72xf32>, vector<72x128xf32>, vector<8x128xf32> -> vector<8x128xf32>
    %c0_93 = arith.constant 0 : index
    %c0_94 = arith.constant 0 : index
    %127 = vector.load %arg10[%c0_93, %c0_94] : memref<8x1xf32, #tpu.memory_space<vmem>>, vector<8x1xf32>
    %128 = vector.broadcast %127 : vector<8x1xf32> to vector<8x128xf32>
    %129 = arith.addf %126, %128 : vector<8x128xf32>
    %cst_95 = arith.constant 0.000000e+00 : f32
    %130 = vector.broadcast %cst_95 : f32 to vector<8x128xf32>
    %131 = arith.maximumf %129, %130 : vector<8x128xf32>
    %c0_96 = arith.constant 0 : index
    %c0_97 = arith.constant 0 : index
    %132 = vector.load %arg2[%c0_96, %c0_97] : memref<8x128xf32, #tpu.memory_space<vmem>>, vector<8x128xf32>
    %c0_98 = arith.constant 0 : index
    %c0_99 = arith.constant 0 : index
    %133 = vector.load %arg3[%c0_98, %c0_99] : memref<1x128xf32, #tpu.memory_space<vmem>>, vector<1x128xf32>
    %134 = vector.broadcast %133 : vector<1x128xf32> to vector<8x128xf32>
    %135 = arith.mulf %134, %131 : vector<8x128xf32>
    %136 = arith.addf %132, %135 : vector<8x128xf32>
    %c0_100 = arith.constant 0 : index
    %c0_101 = arith.constant 0 : index
    %137 = vector.load %arg11[%c0_100, %c0_101] : memref<8x128xf32, #tpu.memory_space<vmem>>, vector<8x128xf32>
    tpu.vector_store %arg11[%c0_100, %c0_101], %136 {strides = array<i32>} : memref<8x128xf32, #tpu.memory_space<vmem>>, vector<8x128xf32>,
    return
  }
  func.func @transform_0(%arg0: i32) -> (i32, i32) {
    %c0_i32 = arith.constant 0 : i32
    %c0_i32_0 = arith.constant 0 : i32
    return %c0_i32, %arg0 : i32, i32
  }
  func.func @transform_1(%arg0: i32) -> (i32, i32) {
    %c0_i32 = arith.constant 0 : i32
    %c0_i32_0 = arith.constant 0 : i32
    return %c0_i32, %arg0 : i32, i32
  }
  func.func @transform_2(%arg0: i32) -> (i32, i32) {
    %c0_i32 = arith.constant 0 : i32
    %c0_i32_0 = arith.constant 0 : i32
    return %c0_i32, %arg0 : i32, i32
  }
  func.func @transform_3(%arg0: i32) -> (i32, i32) {
    %c0_i32 = arith.constant 0 : i32
    %c0_i32_0 = arith.constant 0 : i32
    %c0_i32_1 = arith.constant 0 : i32
    return %c0_i32, %c0_i32_0 : i32, i32
  }
  func.func @transform_4(%arg0: i32) -> (i32, i32) {
    %c0_i32 = arith.constant 0 : i32
    %c0_i32_0 = arith.constant 0 : i32
    %c0_i32_1 = arith.constant 0 : i32
    return %c0_i32, %c0_i32_0 : i32, i32
  }
  func.func @transform_5(%arg0: i32) -> (i32, i32) {
    %c0_i32 = arith.constant 0 : i32
    %c0_i32_0 = arith.constant 0 : i32
    %c0_i32_1 = arith.constant 0 : i32
    return %c0_i32, %c0_i32_0 : i32, i32
  }
  func.func @transform_6(%arg0: i32) -> (i32, i32) {
    %c0_i32 = arith.constant 0 : i32
    %c0_i32_0 = arith.constant 0 : i32
    %c0_i32_1 = arith.constant 0 : i32
    return %c0_i32, %c0_i32_0 : i32, i32
  }
  func.func @transform_7(%arg0: i32) -> (i32, i32) {
    %c0_i32 = arith.constant 0 : i32
    %c0_i32_0 = arith.constant 0 : i32
    %c0_i32_1 = arith.constant 0 : i32
    return %c0_i32, %c0_i32_0 : i32, i32
  }
  func.func @transform_8(%arg0: i32) -> (i32, i32) {
    %c0_i32 = arith.constant 0 : i32
    %c0_i32_0 = arith.constant 0 : i32
    %c0_i32_1 = arith.constant 0 : i32
    return %c0_i32, %c0_i32_0 : i32, i32
  }
  func.func @transform_9(%arg0: i32) -> (i32, i32) {
    %c0_i32 = arith.constant 0 : i32
    %c0_i32_0 = arith.constant 0 : i32
    %c0_i32_1 = arith.constant 0 : i32
    return %c0_i32, %c0_i32_0 : i32, i32
  }
  func.func @transform_10(%arg0: i32) -> (i32, i32) {
    %c0_i32 = arith.constant 0 : i32
    %c0_i32_0 = arith.constant 0 : i32
    return %c0_i32, %arg0 : i32, i32
  }
}

</mosaic_0001>

<llo_original>
// kernel: tpu_custom_call.1
$region0: #{tpu_custom_call.1}
  #allocation0 [shape = 'u32[]', space=smem, size = 0x4, offset = 0x4, fixed_abs, tag = 'smem constant byte address 0x4 - core index']
  #allocation1 [shape = 'u32[144,128]{1,0:T(1,128)}', space=vmem, size = 0x12000, scoped, tag = 'internal scratch']
  #allocation2 [shape = 'f32[72,128]{1,0:T(8,128)}', space=vmem, size = 0x9000, scoped, tag = 'scratch operand']
  %s0 = inlined_call_operand.vmem [shape: f32[8,128], index: 0, kind: input, shape index: {}]
  %s1 = inlined_call_operand.hbm [shape: f32[8,128], index: 1, kind: input, shape index: {}]
  %s2 = inlined_call_operand.vmem [shape: f32[1,128], index: 2, kind: input, shape index: {}]
  %s3 = inlined_call_operand.vmem [shape: f32[9,128], index: 3, kind: input, shape index: {}]
  %s4 = inlined_call_operand.vmem [shape: f32[8,72], index: 4, kind: input, shape index: {}]
  %s5 = inlined_call_operand.vmem [shape: f32[8,1], index: 5, kind: input, shape index: {}]
  %s6 = inlined_call_operand.vmem [shape: f32[8,72], index: 6, kind: input, shape index: {}]
  %s7 = inlined_call_operand.vmem [shape: f32[8,1], index: 7, kind: input, shape index: {}]
  %s8 = inlined_call_operand.vmem [shape: f32[8,72], index: 8, kind: input, shape index: {}]
  %s9 = inlined_call_operand.vmem [shape: f32[8,1], index: 9, kind: input, shape index: {}]
  %s10 = inlined_call_operand.hbm [shape: f32[8,128], index: 10, kind: output, shape index: {}]
  %s11 = sld [smem:[#allocation0]]
  $region54: #{tpu_custom_call.1} parent=0
    _
  %s13 = ssub.s32 1, %s11
  %s14 = scalar_select 0, %s13, %s11
  $region1: #{tpu_custom_call.1} parent=0
    #allocation3 [shape = 'u8[4096]{0}', space=vmem, size = 0x1000, scoped, tag = 'input window, operand 1, single buffered']
    #allocation4 [shape = 's32[1]{0}', space=sflag, size = 0x4, scoped, tag = 'scoped memory for tpu_custom_call.1']
    #allocation5 [shape = 's32[1]{0}', space=sflag, size = 0x4, scoped, tag = 'scoped memory for tpu_custom_call.1']
    #allocation6 [shape = 'u8[4096]{0}', space=vmem, size = 0x1000, scoped, tag = 'output window, operand 0, single buffered']
    %15 = vsyncpa [#allocation4], 0
    %16 = vsyncpa [#allocation5], 0
    // Predicated region
    $region2: #{tpu_custom_call.1} parent=1 // pred_check
      _
    $region3: #{tpu_custom_call.1} parent=1 // pred_check_branch
      %18 = sbr.rel (0) target = $region5
    $region4: #{tpu_custom_call.1} parent=1 // pred_region
      _
    $region5: #{tpu_custom_call.1} parent=1 // pred_fallthru
      _
    // Predicated region
    $region6: #{tpu_custom_call.1} parent=1 // pred_check
      _
    $region7: #{tpu_custom_call.1} parent=1 // pred_check_branch
      %20 = sbr.rel (0) target = $region9
    $region8: #{tpu_custom_call.1} parent=1 // pred_region
      %s22 = ssub.s32 128, 128
      %23 = vsyncadd [#allocation4], %s22
      %s25 = sshll.u32 [#allocation3], 4
      %s26 = int_to_ptr.vmem [resolvable:$true] %s25
      %28 = dma.hbm_to_vmem [thread:$0]  %s1, 128, %s26, [#allocation4]
    $region9: #{tpu_custom_call.1} parent=1 // pred_fallthru
      _
    // Predicated region
    $region10: #{tpu_custom_call.1} parent=1 // pred_check
      _
    $region11: #{tpu_custom_call.1} parent=1 // pred_check_branch
      %30 = sbr.rel (0) target = $region13
    $region12: #{tpu_custom_call.1} parent=1 // pred_region
      _
    $region13: #{tpu_custom_call.1} parent=1 // pred_fallthru
      _
    // Predicated region
    $region14: #{tpu_custom_call.1} parent=1 // pred_check
      _
    $region15: #{tpu_custom_call.1} parent=1 // pred_check_branch
      %32 = sbr.rel (0) target = $region17
    $region16: #{tpu_custom_call.1} parent=1 // pred_region
      _
    $region17: #{tpu_custom_call.1} parent=1 // pred_fallthru
      _
    // Predicated region
    $region18: #{tpu_custom_call.1} parent=1 // pred_check
      _
    $region19: #{tpu_custom_call.1} parent=1 // pred_check_branch
      %34 = sbr.rel (0) target = $region21
    $region20: #{tpu_custom_call.1} parent=1 // pred_region
      _
    $region21: #{tpu_custom_call.1} parent=1 // pred_fallthru
      _
    // Predicated region
    $region22: #{tpu_custom_call.1} parent=1 // pred_check
      _
    $region23: #{tpu_custom_call.1} parent=1 // pred_check_branch
      %36 = sbr.rel (0) target = $region25
    $region24: #{tpu_custom_call.1} parent=1 // pred_region
      _
    $region25: #{tpu_custom_call.1} parent=1 // pred_fallthru
      _
    // Predicated region
    $region26: #{tpu_custom_call.1} parent=1 // pred_check
      _
    $region27: #{tpu_custom_call.1} parent=1 // pred_check_branch
      %38 = sbr.rel (0) target = $region29
    $region28: #{tpu_custom_call.1} parent=1 // pred_region
      _
    $region29: #{tpu_custom_call.1} parent=1 // pred_fallthru
      _
    // Predicated region
    $region30: #{tpu_custom_call.1} parent=1 // pred_check
      _
    $region31: #{tpu_custom_call.1} parent=1 // pred_check_branch
      %40 = sbr.rel (0) target = $region33
    $region32: #{tpu_custom_call.1} parent=1 // pred_region
      _
    $region33: #{tpu_custom_call.1} parent=1 // pred_fallthru
      _
    // Predicated region
    $region34: #{tpu_custom_call.1} parent=1 // pred_check
      _
    $region35: #{tpu_custom_call.1} parent=1 // pred_check_branch
      %42 = sbr.rel (0) target = $region37
    $region36: #{tpu_custom_call.1} parent=1 // pred_region
      _
    $region37: #{tpu_custom_call.1} parent=1 // pred_fallthru
      _
    // Predicated region
    $region38: #{tpu_custom_call.1} parent=1 // pred_check
      _
    $region39: #{tpu_custom_call.1} parent=1 // pred_check_branch
      %44 = sbr.rel (0) target = $region41
    $region40: #{tpu_custom_call.1} parent=1 // pred_region
      _
    $region41: #{tpu_custom_call.1} parent=1 // pred_fallthru
      _
    // Predicated region
    $region42: #{tpu_custom_call.1} parent=1 // pred_check
      _
    $region43: #{tpu_custom_call.1} parent=1 // pred_check_branch
      %46 = sbr.rel (0) target = $region45
    $region44: #{tpu_custom_call.1} parent=1 // pred_region
      %47 = dma.done [#allocation4], 128
    $region45: #{tpu_custom_call.1} parent=1 // pred_fallthru
      _
    %v48 = vld [vmem:[%s3] sm:$0x1]
    %v49 = vld [vmem:[%s3 + $0x1] sm:$0x1]
    %v50 = vld [vmem:[%s3 + $0x2] sm:$0x1]
    %v51 = vld [vmem:[%s3 + $0x3] sm:$0x1]
    %v52 = vld [vmem:[%s3 + $0x5] sm:$0x1]
    %v53 = vld [vmem:[%s3 + $0x6] sm:$0x1]
    %v54 = vld [vmem:[%s3 + $0x7] sm:$0x1]
    %v55 = vld [vmem:[%s3 + $0x8] sm:$0x1]
    %v56 = vld [vmem:[%s0] sm:$0xff]
    %57 = vrot.lane.b32.xlu0 %v56, 9
    %v58 = vpop.permute.xlu0 %57
    %v59 = vlaneseq
    %v60 = vshrl.u32 %v59, 7
    %v61 = vsub.s32 0, %v60
    %v62 = vrot.slane %v48, %v61
    %v63 = vmul.f32 %v58, %v62
    %64 = vst [vmem:[#allocation2] sm:$0xff] %v63
    %65 = vrot.lane.b32.xlu0 %v56, 8
    %v66 = vpop.permute.xlu0 %65
    %v67 = vlaneseq
    %v68 = vshrl.u32 %v67, 7
    %v69 = vsub.s32 0, %v68
    %v70 = vrot.slane %v49, %v69
    %v71 = vmul.f32 %v66, %v70
    %72 = vst [vmem:[#allocation2 + $0x8] sm:$0xff] %v71
    %73 = vrot.lane.b32.xlu0 %v56, 7
    %v74 = vpop.permute.xlu0 %73
    %v75 = vlaneseq
    %v76 = vshrl.u32 %v75, 7
    %v77 = vsub.s32 0, %v76
    %v78 = vrot.slane %v50, %v77
    %v79 = vmul.f32 %v74, %v78
    %80 = vst [vmem:[#allocation2 + $0x10] sm:$0xff] %v79
    %81 = vrot.lane.b32.xlu0 %v56, 1
    %v82 = vpop.permute.xlu0 %81
    %v83 = vlaneseq
    %v84 = vshrl.u32 %v83, 7
    %v85 = vsub.s32 0, %v84
    %v86 = vrot.slane %v51, %v85
    %v87 = vmul.f32 %v82, %v86
    %88 = vst [vmem:[#allocation2 + $0x18] sm:$0xff] %v87
    %89 = vst [vmem:[#allocation2 + $0x20] sm:$0xff] %v56
    %90 = vrot.lane.b32.xlu0 %v56, 127
    %v91 = vpop.permute.xlu0 %90
    %v92 = vlaneseq
    %v93 = vshrl.u32 %v92, 7
    %v94 = vsub.s32 0, %v93
    %v95 = vrot.slane %v52, %v94
    %v96 = vmul.f32 %v91, %v95
    %97 = vst [vmem:[#allocation2 + $0x28] sm:$0xff] %v96
    %98 = vrot.lane.b32.xlu0 %v56, 121
    %v99 = vpop.permute.xlu0 %98
    %v100 = vlaneseq
    %v101 = vshrl.u32 %v100, 7
    %v102 = vsub.s32 0, %v101
    %v103 = vrot.slane %v53, %v102
    %v104 = vmul.f32 %v99, %v103
    %105 = vst [vmem:[#allocation2 + $0x30] sm:$0xff] %v104
    %106 = vrot.lane.b32.xlu0 %v56, 120
    %v107 = vpop.permute.xlu0 %106
    %v108 = vlaneseq
    %v109 = vshrl.u32 %v108, 7
    %v110 = vsub.s32 0, %v109
    %v111 = vrot.slane %v54, %v110
    %v112 = vmul.f32 %v107, %v111
    %113 = vst [vmem:[#allocation2 + $0x38] sm:$0xff] %v112
    %114 = vrot.lane.b32.xlu0 %v56, 119
    %v115 = vpop.permute.xlu0 %114
    %v116 = vlaneseq
    %v117 = vshrl.u32 %v116, 7
    %v118 = vsub.s32 0, %v117
    %v119 = vrot.slane %v55, %v118
    %v120 = vmul.f32 %v115, %v119
    %121 = vst [vmem:[#allocation2 + $0x40] sm:$0xff] %v120
    %v122 = vld [vmem:[%s4] sm:$0xff]
    %v123 = vld [vmem:[#allocation2] sm:$0xff]
    %v124 = vld [vmem:[#allocation2 + $0x8] sm:$0xff]
    %v125 = vld [vmem:[#allocation2 + $0x10] sm:$0xff]
    %v126 = vld [vmem:[#allocation2 + $0x18] sm:$0xff]
    %v127 = vld [vmem:[#allocation2 + $0x20] sm:$0xff]
    %v128 = vld [vmem:[#allocation2 + $0x28] sm:$0xff]
    %v129 = vld [vmem:[#allocation2 + $0x30] sm:$0xff]
    %v130 = vld [vmem:[#allocation2 + $0x38] sm:$0xff]
    %v131 = vld [vmem:[#allocation2 + $0x40] sm:$0xff]
    %v132 = vld [vmem:[%s5] sm:$0xff]
    %134 = vset.pattern.permute.xlu0 0
    %135 = vperm.xlu0 %134, %v132
    %v136 = vpop.permute.xlu0 %135
    %vm138 = vcmask 588800
    %v140 = vsel %vm138, %v122, 0
    %142 = vmatprep.subr.mxu0 0.0
    %143 = vmatpush1.msra.mxu0 %v123
    %144 = vmatprep.subr.mxu0 0.0
    %145 = vmatpush1.msra.mxu0 %v124
    %146 = vmatprep.subr.mxu0 0.0
    %147 = vmatpush1.msra.mxu0 %v125
    %148 = vmatprep.subr.mxu0 0.0
    %149 = vmatpush1.msra.mxu0 %v126
    %150 = vmatprep.subr.mxu0 0.0
    %151 = vmatpush1.msra.mxu0 %v127
    %152 = vmatprep.subr.mxu0 0.0
    %153 = vmatpush1.msra.mxu0 %v128
    %154 = vmatprep.subr.mxu0 0.0
    %155 = vmatpush1.msra.mxu0 %v129
    %156 = vmatprep.subr.mxu0 0.0
    %157 = vmatpush1.msra.mxu0 %v130
    %158 = vmatprep.subr.mxu0 0.0
    %159 = vmatpush1.msra.mxu0 %v131
    %160 = vmatprep.subr.mxu0 0.0
    %161 = vmatpush1.msra.mxu0 0.0
    %162 = vmatprep.subr.mxu0 0.0
    %163 = vmatpush1.msra.mxu0 0.0
    %164 = vmatprep.subr.mxu0 0.0
    %165 = vmatpush1.msra.mxu0 0.0
    %166 = vmatprep.subr.mxu0 0.0
    %167 = vmatpush1.msra.mxu0 0.0
    %168 = vmatprep.subr.mxu0 0.0
    %169 = vmatpush1.msra.mxu0 0.0
    %170 = vmatprep.subr.mxu0 0.0
    %171 = vmatpush1.msra.mxu0 0.0
    %172 = vmatprep.subr.mxu0 0.0
    %173 = vmatpush1.msra.mxu0 0.0
    %174 = vmatprep.subr.mxu0 0.0
    %175 = vmatpush1.msra.mxu0 0.0
    %176 = vmatprep.subr.mxu0 0.0
    %177 = vmatpush1.msra.mxu0 0.0
    %178 = vmatprep.subr.mxu0 0.0
    %179 = vmatpush1.msra.mxu0 0.0
    %180 = vmatprep.subr.mxu0 0.0
    %181 = vmatpush1.msra.mxu0 0.0
    %182 = vmatprep.subr.mxu0 0.0
    %183 = vmatpush1.msra.mxu0 0.0
    %184 = vmatprep.subr.mxu0 0.0
    %185 = vmatpush1.msra.mxu0 0.0
    %186 = vmatprep.subr.mxu0 0.0
    %187 = vmatpush1.msra.mxu0 0.0
    %188 = vmatprep.subr.mxu0 0.0
    %189 = vmatpush1.msra.mxu0 0.0
    %190 = vmatprep.subr.mxu0 0.0
    %191 = vmatpush1.msra.mxu0 0.0
    %192 = vmatprep.subr.mxu0 0.0
    %193 = vmatpush1.msra.mxu0 0.0
    %194 = vmatprep.subr.mxu0 0.0
    %195 = vmatpush1.msra.mxu0 0.0
    %196 = vmatprep.subr.mxu0 0.0
    %197 = vmatpush1.msra.mxu0 0.0
    %198 = vmatprep.subr.mxu0 0.0
    %199 = vmatpush1.msra.mxu0 0.0
    %200 = vmatprep.subr.mxu0 0.0
    %201 = vmatpush1.msra.mxu0 0.0
    %202 = vmatprep.subr.mxu0 0.0
    %203 = vmatpush1.msra.mxu0 0.0
    %204 = vmatprep.subr.mxu0 0.0
    %205 = vmatpush1.msra.mxu0 0.0
    %206 = vmatprep.mubr.f32.mxu0 0.0
    %207 = vmatmul.mubr.f32.gmra.mrb[0].mxu0 %v140
    %v208 = vpop.f32.mrb[0].mxu0
    %v209 = vadd.f32 %v136, %v208
    %v210 = vpop.f32.mrb[0].mxu0
    %211 = vdwg.mxu0
    %v212 = vmax.f32 %v209, 0.0
    %213 = vrot.lane.b32.xlu0 %v212, 9
    %v214 = vpop.permute.xlu0 %213
    %v215 = vmul.f32 %v214, %v62
    %216 = vst [vmem:[#allocation2] sm:$0xff] %v215
    %217 = vrot.lane.b32.xlu0 %v212, 8
    %v218 = vpop.permute.xlu0 %217
    %v219 = vmul.f32 %v218, %v70
    %220 = vst [vmem:[#allocation2 + $0x8] sm:$0xff] %v219
    %221 = vrot.lane.b32.xlu0 %v212, 7
    %v222 = vpop.permute.xlu0 %221
    %v223 = vmul.f32 %v222, %v78
    %224 = vst [vmem:[#allocation2 + $0x10] sm:$0xff] %v223
    %225 = vrot.lane.b32.xlu0 %v212, 1
    %v226 = vpop.permute.xlu0 %225
    %v227 = vmul.f32 %v226, %v86
    %228 = vst [vmem:[#allocation2 + $0x18] sm:$0xff] %v227
    %229 = vst [vmem:[#allocation2 + $0x20] sm:$0xff] %v212
    %230 = vrot.lane.b32.xlu0 %v212, 127
    %v231 = vpop.permute.xlu0 %230
    %v232 = vmul.f32 %v231, %v95
    %233 = vst [vmem:[#allocation2 + $0x28] sm:$0xff] %v232
    %234 = vrot.lane.b32.xlu0 %v212, 121
    %v235 = vpop.permute.xlu0 %234
    %v236 = vmul.f32 %v235, %v103
    %237 = vst [vmem:[#allocation2 + $0x30] sm:$0xff] %v236
    %238 = vrot.lane.b32.xlu0 %v212, 120
    %v239 = vpop.permute.xlu0 %238
    %v240 = vmul.f32 %v239, %v111
    %241 = vst [vmem:[#allocation2 + $0x38] sm:$0xff] %v240
    %242 = vrot.lane.b32.xlu0 %v212, 119
    %v243 = vpop.permute.xlu0 %242
    %v244 = vmul.f32 %v243, %v119
    %245 = vst [vmem:[#allocation2 + $0x40] sm:$0xff] %v244
    %v246 = vld [vmem:[%s6] sm:$0xff]
    %v247 = vld [vmem:[#allocation2] sm:$0xff]
    %v248 = vld [vmem:[#allocation2 + $0x8] sm:$0xff]
    %v249 = vld [vmem:[#allocation2 + $0x10] sm:$0xff]
    %v250 = vld [vmem:[#allocation2 + $0x18] sm:$0xff]
    %v251 = vld [vmem:[#allocation2 + $0x20] sm:$0xff]
    %v252 = vld [vmem:[#allocation2 + $0x28] sm:$0xff]
    %v253 = vld [vmem:[#allocation2 + $0x30] sm:$0xff]
    %v254 = vld [vmem:[#allocation2 + $0x38] sm:$0xff]
    %v255 = vld [vmem:[#allocation2 + $0x40] sm:$0xff]
    %v256 = vld [vmem:[%s7] sm:$0xff]
    %258 = vset.pattern.permute.xlu0 0
    %259 = vperm.xlu0 %258, %v256
    %v260 = vpop.permute.xlu0 %259
    %v263 = vsel %vm138, %v246, 0
    %265 = vmatprep.subr.mxu0 0.0
    %266 = vmatpush1.msra.mxu0 %v247
    %267 = vmatprep.subr.mxu0 0.0
    %268 = vmatpush1.msra.mxu0 %v248
    %269 = vmatprep.subr.mxu0 0.0
    %270 = vmatpush1.msra.mxu0 %v249
    %271 = vmatprep.subr.mxu0 0.0
    %272 = vmatpush1.msra.mxu0 %v250
    %273 = vmatprep.subr.mxu0 0.0
    %274 = vmatpush1.msra.mxu0 %v251
    %275 = vmatprep.subr.mxu0 0.0
    %276 = vmatpush1.msra.mxu0 %v252
    %277 = vmatprep.subr.mxu0 0.0
    %278 = vmatpush1.msra.mxu0 %v253
    %279 = vmatprep.subr.mxu0 0.0
    %280 = vmatpush1.msra.mxu0 %v254
    %281 = vmatprep.subr.mxu0 0.0
    %282 = vmatpush1.msra.mxu0 %v255
    %283 = vmatprep.subr.mxu0 0.0
    %284 = vmatpush1.msra.mxu0 0.0
    %285 = vmatprep.subr.mxu0 0.0
    %286 = vmatpush1.msra.mxu0 0.0
    %287 = vmatprep.subr.mxu0 0.0
    %288 = vmatpush1.msra.mxu0 0.0
    %289 = vmatprep.subr.mxu0 0.0
    %290 = vmatpush1.msra.mxu0 0.0
    %291 = vmatprep.subr.mxu0 0.0
    %292 = vmatpush1.msra.mxu0 0.0
    %293 = vmatprep.subr.mxu0 0.0
    %294 = vmatpush1.msra.mxu0 0.0
    %295 = vmatprep.subr.mxu0 0.0
    %296 = vmatpush1.msra.mxu0 0.0
    %297 = vmatprep.subr.mxu0 0.0
    %298 = vmatpush1.msra.mxu0 0.0
    %299 = vmatprep.subr.mxu0 0.0
    %300 = vmatpush1.msra.mxu0 0.0
    %301 = vmatprep.subr.mxu0 0.0
    %302 = vmatpush1.msra.mxu0 0.0
    %303 = vmatprep.subr.mxu0 0.0
    %304 = vmatpush1.msra.mxu0 0.0
    %305 = vmatprep.subr.mxu0 0.0
    %306 = vmatpush1.msra.mxu0 0.0
    %307 = vmatprep.subr.mxu0 0.0
    %308 = vmatpush1.msra.mxu0 0.0
    %309 = vmatprep.subr.mxu0 0.0
    %310 = vmatpush1.msra.mxu0 0.0
    %311 = vmatprep.subr.mxu0 0.0
    %312 = vmatpush1.msra.mxu0 0.0
    %313 = vmatprep.subr.mxu0 0.0
    %314 = vmatpush1.msra.mxu0 0.0
    %315 = vmatprep.subr.mxu0 0.0
    %316 = vmatpush1.msra.mxu0 0.0
    %317 = vmatprep.subr.mxu0 0.0
    %318 = vmatpush1.msra.mxu0 0.0
    %319 = vmatprep.subr.mxu0 0.0
    %320 = vmatpush1.msra.mxu0 0.0
    %321 = vmatprep.subr.mxu0 0.0
    %322 = vmatpush1.msra.mxu0 0.0
    %323 = vmatprep.subr.mxu0 0.0
    %324 = vmatpush1.msra.mxu0 0.0
    %325 = vmatprep.subr.mxu0 0.0
    %326 = vmatpush1.msra.mxu0 0.0
    %327 = vmatprep.subr.mxu0 0.0
    %328 = vmatpush1.msra.mxu0 0.0
    %329 = vmatprep.mubr.f32.mxu0 0.0
    %330 = vmatmul.mubr.f32.gmra.mrb[0].mxu0 %v263
    %v331 = vpop.f32.mrb[0].mxu0
    %v332 = vadd.f32 %v260, %v331
    %v333 = vpop.f32.mrb[0].mxu0
    %334 = vdwg.mxu0
    %v335 = vmax.f32 %v332, 0.0
    %336 = vrot.lane.b32.xlu0 %v335, 9
    %v337 = vpop.permute.xlu0 %336
    %v338 = vmul.f32 %v337, %v62
    %339 = vst [vmem:[#allocation2] sm:$0xff] %v338
    %340 = vrot.lane.b32.xlu0 %v335, 8
    %v341 = vpop.permute.xlu0 %340
    %v342 = vmul.f32 %v341, %v70
    %343 = vst [vmem:[#allocation2 + $0x8] sm:$0xff] %v342
    %344 = vrot.lane.b32.xlu0 %v335, 7
    %v345 = vpop.permute.xlu0 %344
    %v346 = vmul.f32 %v345, %v78
    %347 = vst [vmem:[#allocation2 + $0x10] sm:$0xff] %v346
    %348 = vrot.lane.b32.xlu0 %v335, 1
    %v349 = vpop.permute.xlu0 %348
    %v350 = vmul.f32 %v349, %v86
    %351 = vst [vmem:[#allocation2 + $0x18] sm:$0xff] %v350
    %352 = vst [vmem:[#allocation2 + $0x20] sm:$0xff] %v335
    %353 = vrot.lane.b32.xlu0 %v335, 127
    %v354 = vpop.permute.xlu0 %353
    %v355 = vmul.f32 %v354, %v95
    %356 = vst [vmem:[#allocation2 + $0x28] sm:$0xff] %v355
    %357 = vrot.lane.b32.xlu0 %v335, 121
    %v358 = vpop.permute.xlu0 %357
    %v359 = vmul.f32 %v358, %v103
    %360 = vst [vmem:[#allocation2 + $0x30] sm:$0xff] %v359
    %361 = vrot.lane.b32.xlu0 %v335, 120
    %v362 = vpop.permute.xlu0 %361
    %v363 = vmul.f32 %v362, %v111
    %364 = vst [vmem:[#allocation2 + $0x38] sm:$0xff] %v363
    %365 = vrot.lane.b32.xlu0 %v335, 119
    %v366 = vpop.permute.xlu0 %365
    %v367 = vmul.f32 %v366, %v119
    %368 = vst [vmem:[#allocation2 + $0x40] sm:$0xff] %v367
    %v369 = vld [vmem:[%s8] sm:$0xff]
    %v370 = vld [vmem:[#allocation2] sm:$0xff]
    %v371 = vld [vmem:[#allocation2 + $0x8] sm:$0xff]
    %v372 = vld [vmem:[#allocation2 + $0x10] sm:$0xff]
    %v373 = vld [vmem:[#allocation2 + $0x18] sm:$0xff]
    %v374 = vld [vmem:[#allocation2 + $0x20] sm:$0xff]
    %v375 = vld [vmem:[#allocation2 + $0x28] sm:$0xff]
    %v376 = vld [vmem:[#allocation2 + $0x30] sm:$0xff]
    %v377 = vld [vmem:[#allocation2 + $0x38] sm:$0xff]
    %v378 = vld [vmem:[#allocation2 + $0x40] sm:$0xff]
    %v379 = vld [vmem:[%s9] sm:$0xff]
    %381 = vset.pattern.permute.xlu0 0
    %382 = vperm.xlu0 %381, %v379
    %v383 = vpop.permute.xlu0 %382
    %v386 = vsel %vm138, %v369, 0
    %388 = vmatprep.subr.mxu0 0.0
    %389 = vmatpush1.msra.mxu0 %v370
    %390 = vmatprep.subr.mxu0 0.0
    %391 = vmatpush1.msra.mxu0 %v371
    %392 = vmatprep.subr.mxu0 0.0
    %393 = vmatpush1.msra.mxu0 %v372
    %394 = vmatprep.subr.mxu0 0.0
    %395 = vmatpush1.msra.mxu0 %v373
    %396 = vmatprep.subr.mxu0 0.0
    %397 = vmatpush1.msra.mxu0 %v374
    %398 = vmatprep.subr.mxu0 0.0
    %399 = vmatpush1.msra.mxu0 %v375
    %400 = vmatprep.subr.mxu0 0.0
    %401 = vmatpush1.msra.mxu0 %v376
    %402 = vmatprep.subr.mxu0 0.0
    %403 = vmatpush1.msra.mxu0 %v377
    %404 = vmatprep.subr.mxu0 0.0
    %405 = vmatpush1.msra.mxu0 %v378
    %406 = vmatprep.subr.mxu0 0.0
    %407 = vmatpush1.msra.mxu0 0.0
    %408 = vmatprep.subr.mxu0 0.0
    %409 = vmatpush1.msra.mxu0 0.0
    %410 = vmatprep.subr.mxu0 0.0
    %411 = vmatpush1.msra.mxu0 0.0
    %412 = vmatprep.subr.mxu0 0.0
    %413 = vmatpush1.msra.mxu0 0.0
    %414 = vmatprep.subr.mxu0 0.0
    %415 = vmatpush1.msra.mxu0 0.0
    %416 = vmatprep.subr.mxu0 0.0
    %417 = vmatpush1.msra.mxu0 0.0
    %418 = vmatprep.subr.mxu0 0.0
    %419 = vmatpush1.msra.mxu0 0.0
    %420 = vmatprep.subr.mxu0 0.0
    %421 = vmatpush1.msra.mxu0 0.0
    %422 = vmatprep.subr.mxu0 0.0
    %423 = vmatpush1.msra.mxu0 0.0
    %424 = vmatprep.subr.mxu0 0.0
    %425 = vmatpush1.msra.mxu0 0.0
    %426 = vmatprep.subr.mxu0 0.0
    %427 = vmatpush1.msra.mxu0 0.0
    %428 = vmatprep.subr.mxu0 0.0
    %429 = vmatpush1.msra.mxu0 0.0
    %430 = vmatprep.subr.mxu0 0.0
    %431 = vmatpush1.msra.mxu0 0.0
    %432 = vmatprep.subr.mxu0 0.0
    %433 = vmatpush1.msra.mxu0 0.0
    %434 = vmatprep.subr.mxu0 0.0
    %435 = vmatpush1.msra.mxu0 0.0
    %436 = vmatprep.subr.mxu0 0.0
    %437 = vmatpush1.msra.mxu0 0.0
    %438 = vmatprep.subr.mxu0 0.0
    %439 = vmatpush1.msra.mxu0 0.0
    %440 = vmatprep.subr.mxu0 0.0
    %441 = vmatpush1.msra.mxu0 0.0
    %442 = vmatprep.subr.mxu0 0.0
    %443 = vmatpush1.msra.mxu0 0.0
    %444 = vmatprep.subr.mxu0 0.0
    %445 = vmatpush1.msra.mxu0 0.0
    %446 = vmatprep.subr.mxu0 0.0
    %447 = vmatpush1.msra.mxu0 0.0
    %448 = vmatprep.subr.mxu0 0.0
    %449 = vmatpush1.msra.mxu0 0.0
    %450 = vmatprep.subr.mxu0 0.0
    %451 = vmatpush1.msra.mxu0 0.0
    %452 = vmatprep.mubr.f32.mxu0 0.0
    %453 = vmatmul.mubr.f32.gmra.mrb[0].mxu0 %v386
    %v454 = vpop.f32.mrb[0].mxu0
    %v455 = vadd.f32 %v383, %v454
    %v456 = vpop.f32.mrb[0].mxu0
    %457 = vdwg.mxu0
    %v458 = vmax.f32 %v455, 0.0
    %v459 = vld [vmem:[#allocation3] sm:$0xff]
    %v460 = vld [vmem:[%s2] sm:$0x1]
    %v462 = vlaneseq
    %v463 = vshrl.u32 %v462, 7
    %v464 = vsub.s32 0, %v463
    %v465 = vrot.slane %v460, %v464
    %v467 = vmul.f32 %v465, %v458
    %v468 = vadd.f32 %v459, %v467
    %469 = vst [vmem:[#allocation6] sm:$0xff] %v468
    // Predicated region
    $region46: #{tpu_custom_call.1} parent=1 // pred_check
      _
    $region47: #{tpu_custom_call.1} parent=1 // pred_check_branch
      %471 = sbr.rel (0) target = $region49
    $region48: #{tpu_custom_call.1} parent=1 // pred_region
      %s473 = ssub.s32 128, 128
      %474 = vsyncadd [#allocation5], %s473
      %s476 = sshll.u32 [#allocation6], 4
      %s477 = int_to_ptr.vmem [resolvable:$true] %s476
      %479 = dma.vmem_to_hbm [thread:$0]  %s477, 128, %s10, [#allocation5]
    $region49: #{tpu_custom_call.1} parent=1 // pred_fallthru
      _
    // Predicated region
    $region50: #{tpu_custom_call.1} parent=1 // pred_check
      _
    $region51: #{tpu_custom_call.1} parent=1 // pred_check_branch
      %481 = sbr.rel (0) target = $region53
    $region52: #{tpu_custom_call.1} parent=1 // pred_region
      %482 = dma.done [#allocation5], 128
    $region53: #{tpu_custom_call.1} parent=1 // pred_fallthru
      _
    %483 = vsyncpa [#allocation4], 1
    %484 = vsyncpa [#allocation5], 1

</llo_original>
